<compile_context>
chip_gen: v7x
topology: tpu7x:2x2x1
jax: 0.10.0
libtpu: 0.0.40
codegen_flags: <defaults>
</compile_context>

<pallas_src>
import jax
import jax.numpy as jnp
from jax.experimental import pallas as pl
from jax.experimental.pallas import tpu as pltpu


# ---------------------------------------------------------------------------
# Variant 1: direct HBM -> HBM DMA (no on-chip round-trip, near-zero TC work).
# ---------------------------------------------------------------------------
def _hbm_copy_kernel(x_hbm, o_hbm, sem):
    cp = pltpu.make_async_copy(x_hbm, o_hbm, sem)
    cp.start()
    cp.wait()


def pallas_hbm_copy(x: jax.Array) -> jax.Array:
    """Identity copy as a single HBM->HBM DMA (no VMEM staging)."""
    return pl.pallas_call(
        _hbm_copy_kernel,
        out_shape=jax.ShapeDtypeStruct(x.shape, x.dtype),
        in_specs=[pl.BlockSpec(memory_space=pl.ANY)],
        out_specs=pl.BlockSpec(memory_space=pl.ANY),
        scratch_shapes=[pltpu.SemaphoreType.DMA],
    )(x)


# ---------------------------------------------------------------------------
# Variant 2: pipelined, lane-dense tiled copy through VMEM (BlockSpec
# double-buffering).  Demonstrates a clean auto-pipelined Pallas pass.
# ---------------------------------------------------------------------------
def _copy_kernel(x_ref, o_ref):
    # One full-tile load, one unmasked lane-dense store per grid step.
    o_ref[...] = x_ref[...]


def pallas_tiled_copy(
    x: jax.Array,
    *,
    lane_width: int = 2048,
    target_block_bytes: int = 2 * 1024 * 1024,
) -> jax.Array:
    """Tiled HBM->VMEM->HBM copy with a lane-dense layout and ~2 MiB blocks."""
    orig_shape = x.shape
    m, n = x.shape
    total = m * n
    itemsize = jnp.dtype(x.dtype).itemsize

    # Lane-widening reshape (zero-cost, row-major) when divisibility allows;
    # otherwise fall back to the original 2-D tiling (n is the full last dim,
    # so the (8,128) block constraint is still satisfied).
    if (lane_width % 128 == 0
            and total % lane_width == 0
            and total // lane_width >= 8):
        rows, cols = total // lane_width, lane_width
        x2 = x.reshape(rows, cols)
    else:
        rows, cols = m, n
        x2 = x

    # Rows per tile: aim at target_block_bytes per buffer, multiple of 8.
    tm = max(8, min(rows, target_block_bytes // (cols * itemsize)))
    tm = (tm // 8) * 8
    if tm <= 0 or rows % 8 != 0:
        tm = rows  # full-extent block is always legal
    grid = (pl.cdiv(rows, tm),)

    # 2 input + 2 output double-buffers, plus headroom; cap at 32 MiB so the
    # same configuration compiles on v5e / v6e / v7x.
    block_bytes = tm * cols * itemsize
    vmem_limit = min(32 * 1024 * 1024,
                     max(4 * block_bytes + (1 << 20), 16 * 1024 * 1024))

    y2 = pl.pallas_call(
        _copy_kernel,
        out_shape=jax.ShapeDtypeStruct((rows, cols), x.dtype),
        grid=grid,
        in_specs=[pl.BlockSpec((tm, cols), lambda i: (i, 0))],
        out_specs=pl.BlockSpec((tm, cols), lambda i: (i, 0)),
        compiler_params=pltpu.CompilerParams(
            dimension_semantics=("parallel",),
            vmem_limit_bytes=vmem_limit,
        ),
    )(x2)
    return y2.reshape(orig_shape)


class Decoder:
    """JAX mirror of the (empty) PyTorch Decoder module."""

    def __init__(self):
        # PyTorch __init__ defines no parameters; nothing to initialize.
        pass

    def forward(self):
        # Matches `def forward(self): return` — no inputs, returns None.
        # Kernel-free on purpose: no pallas_call / HBM round-trip for a no-op.
        return None

    __call__ = forward


if __name__ == "__main__":
    # Exercise the (empty) module exactly as PyTorch would.
    decoder = Decoder()
    out = decoder()
    assert out is None, "Decoder.forward must return None"

    # Demo-only: prove both optimized copy paths compile and run on TPU.
    key = jax.random.PRNGKey(0)
    x = jax.random.normal(key, (512, 256), dtype=jnp.float32)

    # (1) Direct HBM->HBM DMA copy (no VMEM staging).
    y_dma = pallas_hbm_copy(x)
    jax.block_until_ready(y_dma)
    assert jnp.array_equal(y_dma, x), "HBM->HBM DMA copy mismatch"

    # (2) Lane-dense pipelined copy, default ~2 MiB blocks (single step here).
    y_big = pallas_tiled_copy(x)
    jax.block_until_ready(y_big)
    assert jnp.array_equal(y_big, x), "lane-dense tiled copy mismatch"

    # (3) Same kernel with smaller blocks so the grid has >=2 steps and the
    #     double-buffered pipeline is actually exercised at demo size.
    y_pipe = pallas_tiled_copy(x, target_block_bytes=256 * 1024)
    jax.block_until_ready(y_pipe)
    assert jnp.array_equal(y_pipe, x), "pipelined tiled copy mismatch"

    print("KERNEL_OK")
</pallas_src>

<mosaic_0001>
module attributes {stable_mosaic.version = 11 : i64} {
  func.func @_hbm_copy_kernel(%arg0: memref<512x256xf32, #tpu.memory_space<any>>, %arg1: memref<512x256xf32, #tpu.memory_space<any>>, %arg2: memref<!tpu.dma_semaphore, #tpu.memory_space<semaphore_mem>>) attributes {dimension_semantics = [], scalar_prefetch = 0 : i64, scratch_operands = 1 : i64, tpu.core_type = #tpu.core_type<tc>} {
    tpu.enqueue_dma source(%arg0 : memref<512x256xf32, #tpu.memory_space<any>>) target(%arg1 : memref<512x256xf32, #tpu.memory_space<any>>) target_semaphore(%arg2 : memref<!tpu.dma_semaphore, #tpu.memory_space<semaphore_mem>>)
    tpu.wait_dma2 semaphore(%arg2 : memref<!tpu.dma_semaphore, #tpu.memory_space<semaphore_mem>>) src(%arg0 : memref<512x256xf32, #tpu.memory_space<any>>) dst(%arg1 : memref<512x256xf32, #tpu.memory_space<any>>)
    return
  }
}

</mosaic_0001>

<llo_original>
// kernel: tpu_custom_call.1
$region0: #{tpu_custom_call.1}
  #allocation0 [shape = 'u32[]', space=smem, size = 0x4, offset = 0x4, fixed_abs, tag = 'smem constant byte address 0x4 - core index']
  #allocation1 [shape = 'u32[144,128]{1,0:T(1,128)}', space=vmem, size = 0x12000, scoped, tag = 'internal scratch']
  #allocation2 [shape = 's32[1]{0}', space=sflag, size = 0x4, scoped, tag = 'scratch operand']
  #allocation3 [shape = 's32[]', space=sflag, size = 0x4, offset = 0, fixed_abs, tag = 'sflag constant byte address 0x0 - dummy sync flag']
  #allocation4 [shape = 'u32[0]{0}', space=smem, size = 0, offset = 0, fixed_abs, tag = 'smem constant byte address 0x0 - null']
  %s0 = inlined_call_operand.hbm [shape: f32[512,256], index: 0, kind: input, shape index: {}]
  %s1 = inlined_call_operand.hbm [shape: f32[512,256], index: 1, kind: output, shape index: {}]
  %s2 = sld [smem:[#allocation0]]
  $region2: #{tpu_custom_call.1} parent=0
    _
  %s4 = ssub.s32 1, %s2
  %s5 = scalar_select 0, %s4, %s2
  %s7 = sshll.u32 1, 14
  %s8 = sxor.u32 4294967295, %s7
  %s11 = sshll.u32 3, 24
  %s12 = sxor.u32 4294967295, %s11
  %s13 = sand.u32 0, %s12
  %s15 = sor.u32 %s13, 0
  %18 = dma.general %s0, 16384, %s1, [#allocation2], [#allocation3], [#allocation4], %s15, 0
  %s19 = smul.u32 8, 64
  %s20 = smul.u32 %s19, 2
  %s21 = sshll.u32 %s20, 4
  %22 = dma.done [#allocation2], %s21
  %23 = vsyncmov [#allocation2]
  %s24 = vpop.sfrf %23
  %p25 = scmp.eq.s32.totalorder %s24, 0
  %p26 = pneg %p25
  %28 = shalt.err (%p26)

</llo_original>
